<compile_context>
chip_gen: v7x
topology: tpu7x:2x2x1
jax: 0.10.0
libtpu: 0.0.40
codegen_flags: <defaults>
</compile_context>

<pallas_src>
import functools

import jax
import jax.numpy as jnp
from jax.experimental import pallas as pl
from jax.experimental.pallas import tpu as pltpu


# ----------------------------------------------------------------------------
# relative positions (pure-parameter precompute, plain JAX glue)
# ----------------------------------------------------------------------------
def get_relative_positions(window_size: int) -> jnp.ndarray:
    coords_h = jnp.arange(window_size)
    coords_w = jnp.arange(window_size)
    ch, cw = jnp.meshgrid(coords_h, coords_w, indexing="ij")      # torch default 'ij'
    coords = jnp.stack([ch, cw])                                  # (2, ws, ws)
    coords_flatten = coords.reshape(2, -1)                        # (2, N)
    rel = coords_flatten[:, :, None] - coords_flatten[:, None, :] # (2, N, N)
    rel = jnp.transpose(rel, (1, 2, 0)).astype(jnp.float32)       # (N, N, 2)
    rel_log = jnp.sign(rel) * jnp.log(1.0 + jnp.abs(rel))
    return rel_log


# ----------------------------------------------------------------------------
# Kernel 1: meta MLP  -> relative position bias  (run-once precompute)
# ----------------------------------------------------------------------------
def _meta_mlp_kernel(rel_ref, w1_ref, b1_ref, w2_ref, b2_ref, out_ref):
    # First layer has K=2, which would waste 254/256 of the MXU contraction:
    # do it as two VPU FMAs instead.
    c0 = rel_ref[:, 0:1]                                          # (N*N, 1)
    c1 = rel_ref[:, 1:2]                                          # (N*N, 1)
    h = c0 * w1_ref[0:1, :] + c1 * w1_ref[1:2, :] + b1_ref[...]   # (N*N, 256)
    h = jnp.maximum(h, 0.0)                                       # ReLU
    out = jnp.dot(h, w2_ref[...], preferred_element_type=jnp.float32)
    out_ref[...] = out + b2_ref[...]                              # (N*N, nh)


def compute_relative_position_bias(rel_flat, w1, b1, w2, b2, N, num_heads):
    # rel_flat: (N*N, 2); returns (num_heads, N, N), f32
    bias_flat = pl.pallas_call(
        _meta_mlp_kernel,
        out_shape=jax.ShapeDtypeStruct((N * N, num_heads), jnp.float32),
    )(rel_flat, w1, b1.reshape(1, -1), w2, b2.reshape(1, -1))
    bias = bias_flat.reshape(N, N, num_heads)
    return jnp.transpose(bias, (2, 0, 1))                         # (nh, N, N)


# ----------------------------------------------------------------------------
# Kernel 2: windowed multi-head attention (hot path)
# ----------------------------------------------------------------------------
def _window_attn_kernel(bias_ref, q_ref, k_ref, v_ref, out_ref, *, scale):
    W, nh, N, hd = q_ref.shape
    dim = nh * hd
    G = W * nh

    # bias stays resident in VMEM (constant block index); load it once.
    bias = bias_ref[...]                                          # (nh, N, N) f32

    # scale in f32, then cast operands to bf16 for the MXU (f32 accumulate).
    q = (q_ref[...] * scale).astype(jnp.bfloat16).reshape(G, N, hd)
    k = k_ref[...].astype(jnp.bfloat16).reshape(G, N, hd)
    v = v_ref[...].astype(jnp.bfloat16).reshape(G, N, hd)

    # scores for all windows x heads in one batched matmul
    attn = jnp.einsum("gqd,gkd->gqk", q, k,
                      preferred_element_type=jnp.float32)         # (G, N, N)
    attn = attn.reshape(W, nh, N, N) + bias[None]                 # rel-pos bias (f32)

    # softmax over keys (f32); reciprocal on the otherwise-idle EUP slot
    m = jnp.max(attn, axis=-1, keepdims=True)
    e = jnp.exp(attn - m)
    s = jnp.sum(e, axis=-1, keepdims=True)
    p = e * pl.reciprocal(s, approx=True)

    out = jnp.einsum("gqk,gkd->gqd",
                     p.reshape(G, N, N).astype(jnp.bfloat16), v,
                     preferred_element_type=jnp.float32)          # (G, N, hd)

    # head-interleave once per block and store lane-dense as (W, N*dim)
    out = jnp.transpose(out.reshape(W, nh, N, hd), (0, 2, 1, 3))  # (W, N, nh, hd)
    out_ref[0] = out.reshape(W, N * dim).astype(out_ref.dtype)


def _pick_windows_per_block(B_, num_heads, N, head_dim,
                            vmem_budget_bytes=6 * 1024 * 1024,
                            max_windows=64):
    """Largest divisor of B_ whose per-block working set fits the VMEM budget.

    Budget counts double-buffered q/k/v input blocks, the double-buffered
    output block and the (resident) per-window attn scratch, all f32.  Kept
    conservative so it is safe on v7x's 64 MiB VMEM as well as v5e/v6e.
    """
    dim = num_heads * head_dim
    per_window = 4 * (2 * 3 * N * dim        # q, k, v, double-buffered
                      + 2 * N * dim          # output, double-buffered
                      + num_heads * N * N)   # attention scores scratch
    w = max(1, vmem_budget_bytes // per_window)
    w = int(min(w, B_, max_windows))
    while B_ % w:
        w -= 1
    return w


def window_attention(q, k, v, bias, *, scale, windows_per_block=None,
                     vmem_limit_bytes=48 * 1024 * 1024):
    """q, k, v: (B_, nh, N, hd) f32;  bias: (nh, N, N) f32  ->  (B_, N, dim)."""
    B_, nh, N, hd = q.shape
    dim = nh * hd

    W = (windows_per_block if windows_per_block is not None
         else _pick_windows_per_block(B_, nh, N, hd))
    assert W >= 1 and B_ % W == 0, "windows_per_block must divide B_"
    num_blocks = B_ // W

    kernel = functools.partial(_window_attn_kernel, scale=scale)

    cost = pl.CostEstimate(
        flops=4 * B_ * nh * N * N * hd,                 # QK^T + PV
        transcendentals=B_ * nh * N * (N + 1),          # exp + reciprocal
        bytes_accessed=4 * (3 * B_ * nh * N * hd + nh * N * N + B_ * N * dim),
    )

    out = pl.pallas_call(
        kernel,
        out_shape=jax.ShapeDtypeStruct((num_blocks, W, N * dim), q.dtype),
        grid_spec=pltpu.PrefetchScalarGridSpec(
            num_scalar_prefetch=0,
            grid=(num_blocks,),
            in_specs=[
                # bias: constant block index -> DMA'd once, stays resident
                pl.BlockSpec((nh, N, N), lambda b: (0, 0, 0)),
                pl.BlockSpec((W, nh, N, hd), lambda b: (b, 0, 0, 0)),
                pl.BlockSpec((W, nh, N, hd), lambda b: (b, 0, 0, 0)),
                pl.BlockSpec((W, nh, N, hd), lambda b: (b, 0, 0, 0)),
            ],
            out_specs=pl.BlockSpec((1, W, N * dim), lambda b: (b, 0, 0)),
        ),
        compiler_params=pltpu.CompilerParams(
            dimension_semantics=("parallel",),          # megacore sharding on v7x
            vmem_limit_bytes=vmem_limit_bytes),
        cost_estimate=cost,
    )(bias, q, k, v)

    # free reshape: (num_blocks, W, N*dim) is row-major identical to (B_, N, dim)
    return out.reshape(B_, N, dim)


# ----------------------------------------------------------------------------
# Full module forward (parameter setup + kernels)
# ----------------------------------------------------------------------------
def window_attention_forward(qkv, params, *, dim, window_size, num_heads,
                             windows_per_block=None):
    B_, N, _ = qkv.shape
    assert N == window_size * window_size
    head_dim = dim // num_heads
    scale = head_dim ** (-0.5)

    rel = get_relative_positions(window_size)                     # (N, N, 2)
    bias = compute_relative_position_bias(
        rel.reshape(N * N, 2), params["w1"], params["b1"],
        params["w2"], params["b2"], N, num_heads)                 # (nh, N, N)

    # wrapper-side qkv unpack -> q/k/v in (B_, nh, N, hd); fused by XLA, keeps
    # all per-step relayout work out of the hot kernel.
    qkv5 = qkv.reshape(B_, N, 3, num_heads, head_dim).transpose(2, 0, 3, 1, 4)
    q, k, v = qkv5[0], qkv5[1], qkv5[2]                           # (B_, nh, N, hd)

    return window_attention(q, k, v, bias, scale=scale,
                            windows_per_block=windows_per_block)


# pure-JAX f32 reference for validation (mirrors the PyTorch module)
def reference_forward(qkv, params, *, dim, window_size, num_heads):
    B_, N, _ = qkv.shape
    hd = dim // num_heads
    scale = hd ** (-0.5)
    x = qkv.reshape(B_, N, 3, num_heads, hd).transpose(2, 0, 3, 1, 4)
    q, k, v = x[0], x[1], x[2]
    q = q * scale
    attn = jnp.einsum("bhqd,bhkd->bhqk", q, k)
    rel = get_relative_positions(window_size)                     # (N,N,2)
    h = jnp.maximum(rel @ params["w1"] + params["b1"], 0.0)
    bias = (h @ params["w2"] + params["b2"])                      # (N,N,nh)
    bias = jnp.transpose(bias, (2, 0, 1))
    attn = attn + bias[None]
    attn = jax.nn.softmax(attn, axis=-1)
    out = jnp.einsum("bhqk,bhkd->bhqd", attn, v)
    return out.transpose(0, 2, 1, 3).reshape(B_, N, dim)


if __name__ == "__main__":
    # small shapes consistent with the module
    dim = 32
    window_size = 4
    num_heads = 2
    N = window_size * window_size        # 16 tokens per window
    B_ = 8                               # number of windows

    key = jax.random.PRNGKey(0)
    k_qkv, k_w1, k_b1, k_w2, k_b2 = jax.random.split(key, 5)

    qkv = jax.random.normal(k_qkv, (B_, N, 3 * dim), dtype=jnp.float32)

    # meta MLP parameters: Linear(2, 256), Linear(256, num_heads)
    params = {
        "w1": jax.random.normal(k_w1, (2, 256), dtype=jnp.float32) * 0.1,
        "b1": jax.random.normal(k_b1, (256,), dtype=jnp.float32) * 0.1,
        "w2": jax.random.normal(k_w2, (256, num_heads), dtype=jnp.float32) * 0.1,
        "b2": jax.random.normal(k_b2, (num_heads,), dtype=jnp.float32) * 0.1,
    }

    # windows_per_block=4 -> grid of 2 blocks (exercises multi-block indexing)
    out = window_attention_forward(qkv, params, dim=dim,
                                   window_size=window_size,
                                   num_heads=num_heads,
                                   windows_per_block=4)
    out = jax.block_until_ready(out)

    ref = reference_forward(qkv, params, dim=dim,
                            window_size=window_size, num_heads=num_heads)
    assert out.shape == (B_, N, dim)
    # bf16 matmuls + approx reciprocal -> slightly looser tolerance than f32
    assert jnp.allclose(out, ref, atol=5e-2, rtol=5e-2), "mismatch vs reference"

    print("KERNEL_OK")
</pallas_src>

<mosaic_0001>
module attributes {stable_mosaic.version = 11 : i64} {
  func.func @_meta_mlp_kernel(%arg0: memref<256x2xf32, #tpu.memory_space<vmem>>, %arg1: memref<2x256xf32, #tpu.memory_space<vmem>>, %arg2: memref<1x256xf32, #tpu.memory_space<vmem>>, %arg3: memref<256x2xf32, #tpu.memory_space<vmem>>, %arg4: memref<1x2xf32, #tpu.memory_space<vmem>>, %arg5: memref<256x2xf32, #tpu.memory_space<vmem>>) attributes {dimension_semantics = [], scalar_prefetch = 0 : i64, scratch_operands = 0 : i64, tpu.core_type = #tpu.core_type<tc>} {
    %c0 = arith.constant 0 : index
    %c0_0 = arith.constant 0 : index
    %0 = vector.load %arg0[%c0, %c0_0] : memref<256x2xf32, #tpu.memory_space<vmem>>, vector<256x1xf32>
    %c0_1 = arith.constant 0 : index
    %c1 = arith.constant 1 : index
    %1 = vector.load %arg0[%c0_1, %c1] : memref<256x2xf32, #tpu.memory_space<vmem>>, vector<256x1xf32>
    %c0_2 = arith.constant 0 : index
    %c0_3 = arith.constant 0 : index
    %2 = vector.load %arg1[%c0_2, %c0_3] : memref<2x256xf32, #tpu.memory_space<vmem>>, vector<1x256xf32>
    %3 = vector.broadcast %0 : vector<256x1xf32> to vector<256x256xf32>
    %4 = vector.broadcast %2 : vector<1x256xf32> to vector<256x256xf32>
    %5 = arith.mulf %3, %4 : vector<256x256xf32>
    %c1_4 = arith.constant 1 : index
    %c0_5 = arith.constant 0 : index
    %6 = vector.load %arg1[%c1_4, %c0_5] : memref<2x256xf32, #tpu.memory_space<vmem>>, vector<1x256xf32>
    %7 = vector.broadcast %1 : vector<256x1xf32> to vector<256x256xf32>
    %8 = vector.broadcast %6 : vector<1x256xf32> to vector<256x256xf32>
    %9 = arith.mulf %7, %8 : vector<256x256xf32>
    %10 = arith.addf %5, %9 : vector<256x256xf32>
    %c0_6 = arith.constant 0 : index
    %c0_7 = arith.constant 0 : index
    %11 = vector.load %arg2[%c0_6, %c0_7] : memref<1x256xf32, #tpu.memory_space<vmem>>, vector<1x256xf32>
    %12 = vector.broadcast %11 : vector<1x256xf32> to vector<256x256xf32>
    %13 = arith.addf %10, %12 : vector<256x256xf32>
    %cst = arith.constant 0.000000e+00 : f32
    %14 = vector.broadcast %cst : f32 to vector<256x256xf32>
    %15 = arith.maximumf %13, %14 : vector<256x256xf32>
    %c0_8 = arith.constant 0 : index
    %c0_9 = arith.constant 0 : index
    %16 = vector.load %arg3[%c0_8, %c0_9] : memref<256x2xf32, #tpu.memory_space<vmem>>, vector<256x2xf32>
    %cst_10 = arith.constant dense<0.000000e+00> : vector<256x2xf32>
    %17 = tpu.matmul %15, %16, %cst_10 {dimension_numbers = #tpu.dot_dimension_numbers<[1], [0], [0], [1], [0, 0, 1, 1], [], []>} : vector<256x256xf32>, vector<256x2xf32>, vector<256x2xf32> -> vector<256x2xf32>
    %c0_11 = arith.constant 0 : index
    %c0_12 = arith.constant 0 : index
    %18 = vector.load %arg4[%c0_11, %c0_12] : memref<1x2xf32, #tpu.memory_space<vmem>>, vector<1x2xf32>
    %19 = vector.broadcast %18 : vector<1x2xf32> to vector<256x2xf32>
    %20 = arith.addf %17, %19 : vector<256x2xf32>
    %c0_13 = arith.constant 0 : index
    %c0_14 = arith.constant 0 : index
    %21 = vector.load %arg5[%c0_13, %c0_14] : memref<256x2xf32, #tpu.memory_space<vmem>>, vector<256x2xf32>
    tpu.vector_store %arg5[%c0_13, %c0_14], %20 {strides = array<i32>} : memref<256x2xf32, #tpu.memory_space<vmem>>, vector<256x2xf32>,
    return
  }
}

</mosaic_0001>

<llo_original>
// kernel: tpu_custom_call.1
$region0: #{tpu_custom_call.1}
  #allocation0 [shape = 'u32[]', space=smem, size = 0x4, offset = 0x4, fixed_abs, tag = 'smem constant byte address 0x4 - core index']
  #allocation1 [shape = 'u32[144,128]{1,0:T(1,128)}', space=vmem, size = 0x12000, scoped, tag = 'internal scratch']
  %s0 = inlined_call_operand.vmem [shape: f32[256,2], index: 0, kind: input, shape index: {}]
  %s1 = inlined_call_operand.vmem [shape: f32[2,256], index: 1, kind: input, shape index: {}]
  %s2 = inlined_call_operand.vmem [shape: f32[1,256], index: 2, kind: input, shape index: {}]
  %s3 = inlined_call_operand.vmem [shape: f32[256,2], index: 3, kind: input, shape index: {}]
  %s4 = inlined_call_operand.vmem [shape: f32[1,2], index: 4, kind: input, shape index: {}]
  %s5 = inlined_call_operand.vmem [shape: f32[256,2], index: 5, kind: output, shape index: {}]
  %s6 = sld [smem:[#allocation0]]
  $region30: #{tpu_custom_call.1} parent=0
    _
  %s8 = ssub.s32 1, %s6
  %s9 = scalar_select 0, %s8, %s6
  // Predicated region
  $region2: #{tpu_custom_call.1} parent=0 // pred_check
    _
  $region3: #{tpu_custom_call.1} parent=0 // pred_check_branch
    %11 = sbr.rel (0) target = $region5
  $region4: #{tpu_custom_call.1} parent=0 // pred_region
    _
  $region5: #{tpu_custom_call.1} parent=0 // pred_fallthru
    _
  // Predicated region
  $region6: #{tpu_custom_call.1} parent=0 // pred_check
    _
  $region7: #{tpu_custom_call.1} parent=0 // pred_check_branch
    %13 = sbr.rel (0) target = $region9
  $region8: #{tpu_custom_call.1} parent=0 // pred_region
    _
  $region9: #{tpu_custom_call.1} parent=0 // pred_fallthru
    _
  // Predicated region
  $region10: #{tpu_custom_call.1} parent=0 // pred_check
    _
  $region11: #{tpu_custom_call.1} parent=0 // pred_check_branch
    %15 = sbr.rel (0) target = $region13
  $region12: #{tpu_custom_call.1} parent=0 // pred_region
    _
  $region13: #{tpu_custom_call.1} parent=0 // pred_fallthru
    _
  // Predicated region
  $region14: #{tpu_custom_call.1} parent=0 // pred_check
    _
  $region15: #{tpu_custom_call.1} parent=0 // pred_check_branch
    %17 = sbr.rel (0) target = $region17
  $region16: #{tpu_custom_call.1} parent=0 // pred_region
    _
  $region17: #{tpu_custom_call.1} parent=0 // pred_fallthru
    _
  // Predicated region
  $region18: #{tpu_custom_call.1} parent=0 // pred_check
    _
  $region19: #{tpu_custom_call.1} parent=0 // pred_check_branch
    %19 = sbr.rel (0) target = $region21
  $region20: #{tpu_custom_call.1} parent=0 // pred_region
    _
  $region21: #{tpu_custom_call.1} parent=0 // pred_fallthru
    _
  %v20 = vld [vmem:[%s0] sm:$0xff]
  %v21 = vld [vmem:[%s0 + $0x8] sm:$0xff]
  %v22 = vld [vmem:[%s0 + $0x10] sm:$0xff]
  %v23 = vld [vmem:[%s0 + $0x18] sm:$0xff]
  %v24 = vld [vmem:[%s0 + $0x20] sm:$0xff]
  %v25 = vld [vmem:[%s0 + $0x28] sm:$0xff]
  %v26 = vld [vmem:[%s0 + $0x30] sm:$0xff]
  %v27 = vld [vmem:[%s0 + $0x38] sm:$0xff]
  %v28 = vld [vmem:[%s0 + $0x40] sm:$0xff]
  %v29 = vld [vmem:[%s0 + $0x48] sm:$0xff]
  %v30 = vld [vmem:[%s0 + $0x50] sm:$0xff]
  %v31 = vld [vmem:[%s0 + $0x58] sm:$0xff]
  %v32 = vld [vmem:[%s0 + $0x60] sm:$0xff]
  %v33 = vld [vmem:[%s0 + $0x68] sm:$0xff]
  %v34 = vld [vmem:[%s0 + $0x70] sm:$0xff]
  %v35 = vld [vmem:[%s0 + $0x78] sm:$0xff]
  %v36 = vld [vmem:[%s0 + $0x80] sm:$0xff]
  %v37 = vld [vmem:[%s0 + $0x88] sm:$0xff]
  %v38 = vld [vmem:[%s0 + $0x90] sm:$0xff]
  %v39 = vld [vmem:[%s0 + $0x98] sm:$0xff]
  %v40 = vld [vmem:[%s0 + $0xa0] sm:$0xff]
  %v41 = vld [vmem:[%s0 + $0xa8] sm:$0xff]
  %v42 = vld [vmem:[%s0 + $0xb0] sm:$0xff]
  %v43 = vld [vmem:[%s0 + $0xb8] sm:$0xff]
  %v44 = vld [vmem:[%s0 + $0xc0] sm:$0xff]
  %v45 = vld [vmem:[%s0 + $0xc8] sm:$0xff]
  %v46 = vld [vmem:[%s0 + $0xd0] sm:$0xff]
  %v47 = vld [vmem:[%s0 + $0xd8] sm:$0xff]
  %v48 = vld [vmem:[%s0 + $0xe0] sm:$0xff]
  %v49 = vld [vmem:[%s0 + $0xe8] sm:$0xff]
  %v50 = vld [vmem:[%s0 + $0xf0] sm:$0xff]
  %v51 = vld [vmem:[%s0 + $0xf8] sm:$0xff]
  %v52 = vld [vmem:[%s1] ss:$2 sm:$0x3]
  %54 = vset.pattern.permute.xlu0 0
  %55 = vperm.xlu0 %54, %v20
  %v56 = vpop.permute.xlu0 %55
  %59 = vset.pattern.permute.xlu0 0
  %60 = vperm.xlu0 %59, %v21
  %v61 = vpop.permute.xlu0 %60
  %64 = vset.pattern.permute.xlu0 0
  %65 = vperm.xlu0 %64, %v22
  %v66 = vpop.permute.xlu0 %65
  %69 = vset.pattern.permute.xlu0 0
  %70 = vperm.xlu0 %69, %v23
  %v71 = vpop.permute.xlu0 %70
  %74 = vset.pattern.permute.xlu0 0
  %75 = vperm.xlu0 %74, %v24
  %v76 = vpop.permute.xlu0 %75
  %79 = vset.pattern.permute.xlu0 0
  %80 = vperm.xlu0 %79, %v25
  %v81 = vpop.permute.xlu0 %80
  %84 = vset.pattern.permute.xlu0 0
  %85 = vperm.xlu0 %84, %v26
  %v86 = vpop.permute.xlu0 %85
  %89 = vset.pattern.permute.xlu0 0
  %90 = vperm.xlu0 %89, %v27
  %v91 = vpop.permute.xlu0 %90
  %94 = vset.pattern.permute.xlu0 0
  %95 = vperm.xlu0 %94, %v28
  %v96 = vpop.permute.xlu0 %95
  %99 = vset.pattern.permute.xlu0 0
  %100 = vperm.xlu0 %99, %v29
  %v101 = vpop.permute.xlu0 %100
  %104 = vset.pattern.permute.xlu0 0
  %105 = vperm.xlu0 %104, %v30
  %v106 = vpop.permute.xlu0 %105
  %109 = vset.pattern.permute.xlu0 0
  %110 = vperm.xlu0 %109, %v31
  %v111 = vpop.permute.xlu0 %110
  %114 = vset.pattern.permute.xlu0 0
  %115 = vperm.xlu0 %114, %v32
  %v116 = vpop.permute.xlu0 %115
  %119 = vset.pattern.permute.xlu0 0
  %120 = vperm.xlu0 %119, %v33
  %v121 = vpop.permute.xlu0 %120
  %124 = vset.pattern.permute.xlu0 0
  %125 = vperm.xlu0 %124, %v34
  %v126 = vpop.permute.xlu0 %125
  %129 = vset.pattern.permute.xlu0 0
  %130 = vperm.xlu0 %129, %v35
  %v131 = vpop.permute.xlu0 %130
  %134 = vset.pattern.permute.xlu0 0
  %135 = vperm.xlu0 %134, %v36
  %v136 = vpop.permute.xlu0 %135
  %139 = vset.pattern.permute.xlu0 0
  %140 = vperm.xlu0 %139, %v37
  %v141 = vpop.permute.xlu0 %140
  %144 = vset.pattern.permute.xlu0 0
  %145 = vperm.xlu0 %144, %v38
  %v146 = vpop.permute.xlu0 %145
  %149 = vset.pattern.permute.xlu0 0
  %150 = vperm.xlu0 %149, %v39
  %v151 = vpop.permute.xlu0 %150
  %154 = vset.pattern.permute.xlu0 0
  %155 = vperm.xlu0 %154, %v40
  %v156 = vpop.permute.xlu0 %155
  %159 = vset.pattern.permute.xlu0 0
  %160 = vperm.xlu0 %159, %v41
  %v161 = vpop.permute.xlu0 %160
  %164 = vset.pattern.permute.xlu0 0
  %165 = vperm.xlu0 %164, %v42
  %v166 = vpop.permute.xlu0 %165
  %169 = vset.pattern.permute.xlu0 0
  %170 = vperm.xlu0 %169, %v43
  %v171 = vpop.permute.xlu0 %170
  %174 = vset.pattern.permute.xlu0 0
  %175 = vperm.xlu0 %174, %v44
  %v176 = vpop.permute.xlu0 %175
  %179 = vset.pattern.permute.xlu0 0
  %180 = vperm.xlu0 %179, %v45
  %v181 = vpop.permute.xlu0 %180
  %184 = vset.pattern.permute.xlu0 0
  %185 = vperm.xlu0 %184, %v46
  %v186 = vpop.permute.xlu0 %185
  %189 = vset.pattern.permute.xlu0 0
  %190 = vperm.xlu0 %189, %v47
  %v191 = vpop.permute.xlu0 %190
  %194 = vset.pattern.permute.xlu0 0
  %195 = vperm.xlu0 %194, %v48
  %v196 = vpop.permute.xlu0 %195
  %199 = vset.pattern.permute.xlu0 0
  %200 = vperm.xlu0 %199, %v49
  %v201 = vpop.permute.xlu0 %200
  %204 = vset.pattern.permute.xlu0 0
  %205 = vperm.xlu0 %204, %v50
  %v206 = vpop.permute.xlu0 %205
  %209 = vset.pattern.permute.xlu0 0
  %210 = vperm.xlu0 %209, %v51
  %v211 = vpop.permute.xlu0 %210
  %v214 = vlaneseq
  %v215 = vshrl.u32 %v214, 7
  %v216 = vsub.s32 0, %v215
  %v217 = vrot.slane %v52, %v216
  %v218 = vlaneseq
  %v219 = vshrl.u32 %v218, 7
  %v220 = vsub.s32 1, %v219
  %v221 = vrot.slane %v52, %v220
  %v224 = vmul.f32 %v56, %v217
  %v225 = vmul.f32 %v56, %v221
  %v226 = vmul.f32 %v61, %v217
  %v227 = vmul.f32 %v61, %v221
  %v228 = vmul.f32 %v66, %v217
  %v229 = vmul.f32 %v66, %v221
  %v230 = vmul.f32 %v71, %v217
  %v231 = vmul.f32 %v71, %v221
  %v232 = vmul.f32 %v76, %v217
  %v233 = vmul.f32 %v76, %v221
  %v234 = vmul.f32 %v81, %v217
  %v235 = vmul.f32 %v81, %v221
  %v236 = vmul.f32 %v86, %v217
  %v237 = vmul.f32 %v86, %v221
  %v238 = vmul.f32 %v91, %v217
  %v239 = vmul.f32 %v91, %v221
  %v240 = vmul.f32 %v96, %v217
  %v241 = vmul.f32 %v96, %v221
  %v242 = vmul.f32 %v101, %v217
  %v243 = vmul.f32 %v101, %v221
  %v244 = vmul.f32 %v106, %v217
  %v245 = vmul.f32 %v106, %v221
  %v246 = vmul.f32 %v111, %v217
  %v247 = vmul.f32 %v111, %v221
  %v248 = vmul.f32 %v116, %v217
  %v249 = vmul.f32 %v116, %v221
  %v250 = vmul.f32 %v121, %v217
  %v251 = vmul.f32 %v121, %v221
  %v252 = vmul.f32 %v126, %v217
  %v253 = vmul.f32 %v126, %v221
  %v254 = vmul.f32 %v131, %v217
  %v255 = vmul.f32 %v131, %v221
  %v256 = vmul.f32 %v136, %v217
  %v257 = vmul.f32 %v136, %v221
  %v258 = vmul.f32 %v141, %v217
  %v259 = vmul.f32 %v141, %v221
  %v260 = vmul.f32 %v146, %v217
  %v261 = vmul.f32 %v146, %v221
  %v262 = vmul.f32 %v151, %v217
  %v263 = vmul.f32 %v151, %v221
  %v264 = vmul.f32 %v156, %v217
  %v265 = vmul.f32 %v156, %v221
  %v266 = vmul.f32 %v161, %v217
  %v267 = vmul.f32 %v161, %v221
  %v268 = vmul.f32 %v166, %v217
  %v269 = vmul.f32 %v166, %v221
  %v270 = vmul.f32 %v171, %v217
  %v271 = vmul.f32 %v171, %v221
  %v272 = vmul.f32 %v176, %v217
  %v273 = vmul.f32 %v176, %v221
  %v274 = vmul.f32 %v181, %v217
  %v275 = vmul.f32 %v181, %v221
  %v276 = vmul.f32 %v186, %v217
  %v277 = vmul.f32 %v186, %v221
  %v278 = vmul.f32 %v191, %v217
  %v279 = vmul.f32 %v191, %v221
  %v280 = vmul.f32 %v196, %v217
  %v281 = vmul.f32 %v196, %v221
  %v282 = vmul.f32 %v201, %v217
  %v283 = vmul.f32 %v201, %v221
  %v284 = vmul.f32 %v206, %v217
  %v285 = vmul.f32 %v206, %v221
  %v286 = vmul.f32 %v211, %v217
  %v287 = vmul.f32 %v211, %v221
  %s288 = scalar_lea.vmem %s1, 1
  %v289 = vld [vmem:[%s288] ss:$2 sm:$0x3]
  %290 = vset.pattern.permute.xlu0 1
  %291 = vperm.xlu0 %290, %v20
  %v292 = vpop.permute.xlu0 %291
  %294 = vset.pattern.permute.xlu0 1
  %295 = vperm.xlu0 %294, %v21
  %v296 = vpop.permute.xlu0 %295
  %298 = vset.pattern.permute.xlu0 1
  %299 = vperm.xlu0 %298, %v22
  %v300 = vpop.permute.xlu0 %299
  %302 = vset.pattern.permute.xlu0 1
  %303 = vperm.xlu0 %302, %v23
  %v304 = vpop.permute.xlu0 %303
  %306 = vset.pattern.permute.xlu0 1
  %307 = vperm.xlu0 %306, %v24
  %v308 = vpop.permute.xlu0 %307
  %310 = vset.pattern.permute.xlu0 1
  %311 = vperm.xlu0 %310, %v25
  %v312 = vpop.permute.xlu0 %311
  %314 = vset.pattern.permute.xlu0 1
  %315 = vperm.xlu0 %314, %v26
  %v316 = vpop.permute.xlu0 %315
  %318 = vset.pattern.permute.xlu0 1
  %319 = vperm.xlu0 %318, %v27
  %v320 = vpop.permute.xlu0 %319
  %322 = vset.pattern.permute.xlu0 1
  %323 = vperm.xlu0 %322, %v28
  %v324 = vpop.permute.xlu0 %323
  %326 = vset.pattern.permute.xlu0 1
  %327 = vperm.xlu0 %326, %v29
  %v328 = vpop.permute.xlu0 %327
  %330 = vset.pattern.permute.xlu0 1
  %331 = vperm.xlu0 %330, %v30
  %v332 = vpop.permute.xlu0 %331
  %334 = vset.pattern.permute.xlu0 1
  %335 = vperm.xlu0 %334, %v31
  %v336 = vpop.permute.xlu0 %335
  %338 = vset.pattern.permute.xlu0 1
  %339 = vperm.xlu0 %338, %v32
  %v340 = vpop.permute.xlu0 %339
  %342 = vset.pattern.permute.xlu0 1
  %343 = vperm.xlu0 %342, %v33
  %v344 = vpop.permute.xlu0 %343
  %346 = vset.pattern.permute.xlu0 1
  %347 = vperm.xlu0 %346, %v34
  %v348 = vpop.permute.xlu0 %347
  %350 = vset.pattern.permute.xlu0 1
  %351 = vperm.xlu0 %350, %v35
  %v352 = vpop.permute.xlu0 %351
  %354 = vset.pattern.permute.xlu0 1
  %355 = vperm.xlu0 %354, %v36
  %v356 = vpop.permute.xlu0 %355
  %358 = vset.pattern.permute.xlu0 1
  %359 = vperm.xlu0 %358, %v37
  %v360 = vpop.permute.xlu0 %359
  %362 = vset.pattern.permute.xlu0 1
  %363 = vperm.xlu0 %362, %v38
  %v364 = vpop.permute.xlu0 %363
  %366 = vset.pattern.permute.xlu0 1
  %367 = vperm.xlu0 %366, %v39
  %v368 = vpop.permute.xlu0 %367
  %370 = vset.pattern.permute.xlu0 1
  %371 = vperm.xlu0 %370, %v40
  %v372 = vpop.permute.xlu0 %371
  %374 = vset.pattern.permute.xlu0 1
  %375 = vperm.xlu0 %374, %v41
  %v376 = vpop.permute.xlu0 %375
  %378 = vset.pattern.permute.xlu0 1
  %379 = vperm.xlu0 %378, %v42
  %v380 = vpop.permute.xlu0 %379
  %382 = vset.pattern.permute.xlu0 1
  %383 = vperm.xlu0 %382, %v43
  %v384 = vpop.permute.xlu0 %383
  %386 = vset.pattern.permute.xlu0 1
  %387 = vperm.xlu0 %386, %v44
  %v388 = vpop.permute.xlu0 %387
  %390 = vset.pattern.permute.xlu0 1
  %391 = vperm.xlu0 %390, %v45
  %v392 = vpop.permute.xlu0 %391
  %394 = vset.pattern.permute.xlu0 1
  %395 = vperm.xlu0 %394, %v46
  %v396 = vpop.permute.xlu0 %395
  %398 = vset.pattern.permute.xlu0 1
  %399 = vperm.xlu0 %398, %v47
  %v400 = vpop.permute.xlu0 %399
  %402 = vset.pattern.permute.xlu0 1
  %403 = vperm.xlu0 %402, %v48
  %v404 = vpop.permute.xlu0 %403
  %406 = vset.pattern.permute.xlu0 1
  %407 = vperm.xlu0 %406, %v49
  %v408 = vpop.permute.xlu0 %407
  %410 = vset.pattern.permute.xlu0 1
  %411 = vperm.xlu0 %410, %v50
  %v412 = vpop.permute.xlu0 %411
  %414 = vset.pattern.permute.xlu0 1
  %415 = vperm.xlu0 %414, %v51
  %v416 = vpop.permute.xlu0 %415
  %v419 = vlaneseq
  %v420 = vshrl.u32 %v419, 7
  %v421 = vsub.s32 0, %v420
  %v422 = vrot.slane %v289, %v421
  %v423 = vlaneseq
  %v424 = vshrl.u32 %v423, 7
  %v425 = vsub.s32 1, %v424
  %v426 = vrot.slane %v289, %v425
  %v429 = vmul.f32 %v292, %v422
  %v430 = vmul.f32 %v292, %v426
  %v431 = vmul.f32 %v296, %v422
  %v432 = vmul.f32 %v296, %v426
  %v433 = vmul.f32 %v300, %v422
  %v434 = vmul.f32 %v300, %v426
  %v435 = vmul.f32 %v304, %v422
  %v436 = vmul.f32 %v304, %v426
  %v437 = vmul.f32 %v308, %v422
  %v438 = vmul.f32 %v308, %v426
  %v439 = vmul.f32 %v312, %v422
  %v440 = vmul.f32 %v312, %v426
  %v441 = vmul.f32 %v316, %v422
  %v442 = vmul.f32 %v316, %v426
  %v443 = vmul.f32 %v320, %v422
  %v444 = vmul.f32 %v320, %v426
  %v445 = vmul.f32 %v324, %v422
  %v446 = vmul.f32 %v324, %v426
  %v447 = vmul.f32 %v328, %v422
  %v448 = vmul.f32 %v328, %v426
  %v449 = vmul.f32 %v332, %v422
  %v450 = vmul.f32 %v332, %v426
  %v451 = vmul.f32 %v336, %v422
  %v452 = vmul.f32 %v336, %v426
  %v453 = vmul.f32 %v340, %v422
  %v454 = vmul.f32 %v340, %v426
  %v455 = vmul.f32 %v344, %v422
  %v456 = vmul.f32 %v344, %v426
  %v457 = vmul.f32 %v348, %v422
  %v458 = vmul.f32 %v348, %v426
  %v459 = vmul.f32 %v352, %v422
  %v460 = vmul.f32 %v352, %v426
  %v461 = vmul.f32 %v356, %v422
  %v462 = vmul.f32 %v356, %v426
  %v463 = vmul.f32 %v360, %v422
  %v464 = vmul.f32 %v360, %v426
  %v465 = vmul.f32 %v364, %v422
  %v466 = vmul.f32 %v364, %v426
  %v467 = vmul.f32 %v368, %v422
  %v468 = vmul.f32 %v368, %v426
  %v469 = vmul.f32 %v372, %v422
  %v470 = vmul.f32 %v372, %v426
  %v471 = vmul.f32 %v376, %v422
  %v472 = vmul.f32 %v376, %v426
  %v473 = vmul.f32 %v380, %v422
  %v474 = vmul.f32 %v380, %v426
  %v475 = vmul.f32 %v384, %v422
  %v476 = vmul.f32 %v384, %v426
  %v477 = vmul.f32 %v388, %v422
  %v478 = vmul.f32 %v388, %v426
  %v479 = vmul.f32 %v392, %v422
  %v480 = vmul.f32 %v392, %v426
  %v481 = vmul.f32 %v396, %v422
  %v482 = vmul.f32 %v396, %v426
  %v483 = vmul.f32 %v400, %v422
  %v484 = vmul.f32 %v400, %v426
  %v485 = vmul.f32 %v404, %v422
  %v486 = vmul.f32 %v404, %v426
  %v487 = vmul.f32 %v408, %v422
  %v488 = vmul.f32 %v408, %v426
  %v489 = vmul.f32 %v412, %v422
  %v490 = vmul.f32 %v412, %v426
  %v491 = vmul.f32 %v416, %v422
  %v492 = vmul.f32 %v416, %v426
  %v493 = vadd.f32 %v224, %v429
  %v494 = vadd.f32 %v225, %v430
  %v495 = vadd.f32 %v226, %v431
  %v496 = vadd.f32 %v227, %v432
  %v497 = vadd.f32 %v228, %v433
  %v498 = vadd.f32 %v229, %v434
  %v499 = vadd.f32 %v230, %v435
  %v500 = vadd.f32 %v231, %v436
  %v501 = vadd.f32 %v232, %v437
  %v502 = vadd.f32 %v233, %v438
  %v503 = vadd.f32 %v234, %v439
  %v504 = vadd.f32 %v235, %v440
  %v505 = vadd.f32 %v236, %v441
  %v506 = vadd.f32 %v237, %v442
  %v507 = vadd.f32 %v238, %v443
  %v508 = vadd.f32 %v239, %v444
  %v509 = vadd.f32 %v240, %v445
  %v510 = vadd.f32 %v241, %v446
  %v511 = vadd.f32 %v242, %v447
  %v512 = vadd.f32 %v243, %v448
  %v513 = vadd.f32 %v244, %v449
  %v514 = vadd.f32 %v245, %v450
  %v515 = vadd.f32 %v246, %v451
  %v516 = vadd.f32 %v247, %v452
  %v517 = vadd.f32 %v248, %v453
  %v518 = vadd.f32 %v249, %v454
  %v519 = vadd.f32 %v250, %v455
  %v520 = vadd.f32 %v251, %v456
  %v521 = vadd.f32 %v252, %v457
  %v522 = vadd.f32 %v253, %v458
  %v523 = vadd.f32 %v254, %v459
  %v524 = vadd.f32 %v255, %v460
  %v525 = vadd.f32 %v256, %v461
  %v526 = vadd.f32 %v257, %v462
  %v527 = vadd.f32 %v258, %v463
  %v528 = vadd.f32 %v259, %v464
  %v529 = vadd.f32 %v260, %v465
  %v530 = vadd.f32 %v261, %v466
  %v531 = vadd.f32 %v262, %v467
  %v532 = vadd.f32 %v263, %v468
  %v533 = vadd.f32 %v264, %v469
  %v534 = vadd.f32 %v265, %v470
  %v535 = vadd.f32 %v266, %v471
  %v536 = vadd.f32 %v267, %v472
  %v537 = vadd.f32 %v268, %v473
  %v538 = vadd.f32 %v269, %v474
  %v539 = vadd.f32 %v270, %v475
  %v540 = vadd.f32 %v271, %v476
  %v541 = vadd.f32 %v272, %v477
  %v542 = vadd.f32 %v273, %v478
  %v543 = vadd.f32 %v274, %v479
  %v544 = vadd.f32 %v275, %v480
  %v545 = vadd.f32 %v276, %v481
  %v546 = vadd.f32 %v277, %v482
  %v547 = vadd.f32 %v278, %v483
  %v548 = vadd.f32 %v279, %v484
  %v549 = vadd.f32 %v280, %v485
  %v550 = vadd.f32 %v281, %v486
  %v551 = vadd.f32 %v282, %v487
  %v552 = vadd.f32 %v283, %v488
  %v553 = vadd.f32 %v284, %v489
  %v554 = vadd.f32 %v285, %v490
  %v555 = vadd.f32 %v286, %v491
  %v556 = vadd.f32 %v287, %v492
  %v557 = vld [vmem:[%s2] sm:$0x3]
  %v559 = vlaneseq
  %v560 = vshrl.u32 %v559, 7
  %v561 = vsub.s32 0, %v560
  %v562 = vrot.slane %v557, %v561
  %v563 = vlaneseq
  %v564 = vshrl.u32 %v563, 7
  %v565 = vsub.s32 1, %v564
  %v566 = vrot.slane %v557, %v565
  %v569 = vadd.f32 %v493, %v562
  %v570 = vadd.f32 %v494, %v566
  %v571 = vadd.f32 %v495, %v562
  %v572 = vadd.f32 %v496, %v566
  %v573 = vadd.f32 %v497, %v562
  %v574 = vadd.f32 %v498, %v566
  %v575 = vadd.f32 %v499, %v562
  %v576 = vadd.f32 %v500, %v566
  %v577 = vadd.f32 %v501, %v562
  %v578 = vadd.f32 %v502, %v566
  %v579 = vadd.f32 %v503, %v562
  %v580 = vadd.f32 %v504, %v566
  %v581 = vadd.f32 %v505, %v562
  %v582 = vadd.f32 %v506, %v566
  %v583 = vadd.f32 %v507, %v562
  %v584 = vadd.f32 %v508, %v566
  %v585 = vadd.f32 %v509, %v562
  %v586 = vadd.f32 %v510, %v566
  %v587 = vadd.f32 %v511, %v562
  %v588 = vadd.f32 %v512, %v566
  %v589 = vadd.f32 %v513, %v562
  %v590 = vadd.f32 %v514, %v566
  %v591 = vadd.f32 %v515, %v562
  %v592 = vadd.f32 %v516, %v566
  %v593 = vadd.f32 %v517, %v562
  %v594 = vadd.f32 %v518, %v566
  %v595 = vadd.f32 %v519, %v562
  %v596 = vadd.f32 %v520, %v566
  %v597 = vadd.f32 %v521, %v562
  %v598 = vadd.f32 %v522, %v566
  %v599 = vadd.f32 %v523, %v562
  %v600 = vadd.f32 %v524, %v566
  %v601 = vadd.f32 %v525, %v562
  %v602 = vadd.f32 %v526, %v566
  %v603 = vadd.f32 %v527, %v562
  %v604 = vadd.f32 %v528, %v566
  %v605 = vadd.f32 %v529, %v562
  %v606 = vadd.f32 %v530, %v566
  %v607 = vadd.f32 %v531, %v562
  %v608 = vadd.f32 %v532, %v566
  %v609 = vadd.f32 %v533, %v562
  %v610 = vadd.f32 %v534, %v566
  %v611 = vadd.f32 %v535, %v562
  %v612 = vadd.f32 %v536, %v566
  %v613 = vadd.f32 %v537, %v562
  %v614 = vadd.f32 %v538, %v566
  %v615 = vadd.f32 %v539, %v562
  %v616 = vadd.f32 %v540, %v566
  %v617 = vadd.f32 %v541, %v562
  %v618 = vadd.f32 %v542, %v566
  %v619 = vadd.f32 %v543, %v562
  %v620 = vadd.f32 %v544, %v566
  %v621 = vadd.f32 %v545, %v562
  %v622 = vadd.f32 %v546, %v566
  %v623 = vadd.f32 %v547, %v562
  %v624 = vadd.f32 %v548, %v566
  %v625 = vadd.f32 %v549, %v562
  %v626 = vadd.f32 %v550, %v566
  %v627 = vadd.f32 %v551, %v562
  %v628 = vadd.f32 %v552, %v566
  %v629 = vadd.f32 %v553, %v562
  %v630 = vadd.f32 %v554, %v566
  %v631 = vadd.f32 %v555, %v562
  %v632 = vadd.f32 %v556, %v566
  %v633 = vmax.f32 %v569, 0.0
  %v634 = vmax.f32 %v570, 0.0
  %v635 = vmax.f32 %v571, 0.0
  %v636 = vmax.f32 %v572, 0.0
  %v637 = vmax.f32 %v573, 0.0
  %v638 = vmax.f32 %v574, 0.0
  %v639 = vmax.f32 %v575, 0.0
  %v640 = vmax.f32 %v576, 0.0
  %v641 = vmax.f32 %v577, 0.0
  %v642 = vmax.f32 %v578, 0.0
  %v643 = vmax.f32 %v579, 0.0
  %v644 = vmax.f32 %v580, 0.0
  %v645 = vmax.f32 %v581, 0.0
  %v646 = vmax.f32 %v582, 0.0
  %v647 = vmax.f32 %v583, 0.0
  %v648 = vmax.f32 %v584, 0.0
  %v649 = vmax.f32 %v585, 0.0
  %v650 = vmax.f32 %v586, 0.0
  %v651 = vmax.f32 %v587, 0.0
  %v652 = vmax.f32 %v588, 0.0
  %v653 = vmax.f32 %v589, 0.0
  %v654 = vmax.f32 %v590, 0.0
  %v655 = vmax.f32 %v591, 0.0
  %v656 = vmax.f32 %v592, 0.0
  %v657 = vmax.f32 %v593, 0.0
  %v658 = vmax.f32 %v594, 0.0
  %v659 = vmax.f32 %v595, 0.0
  %v660 = vmax.f32 %v596, 0.0
  %v661 = vmax.f32 %v597, 0.0
  %v662 = vmax.f32 %v598, 0.0
  %v663 = vmax.f32 %v599, 0.0
  %v664 = vmax.f32 %v600, 0.0
  %v665 = vmax.f32 %v601, 0.0
  %v666 = vmax.f32 %v602, 0.0
  %v667 = vmax.f32 %v603, 0.0
  %v668 = vmax.f32 %v604, 0.0
  %v669 = vmax.f32 %v605, 0.0
  %v670 = vmax.f32 %v606, 0.0
  %v671 = vmax.f32 %v607, 0.0
  %v672 = vmax.f32 %v608, 0.0
  %v673 = vmax.f32 %v609, 0.0
  %v674 = vmax.f32 %v610, 0.0
  %v675 = vmax.f32 %v611, 0.0
  %v676 = vmax.f32 %v612, 0.0
  %v677 = vmax.f32 %v613, 0.0
  %v678 = vmax.f32 %v614, 0.0
  %v679 = vmax.f32 %v615, 0.0
  %v680 = vmax.f32 %v616, 0.0
  %v681 = vmax.f32 %v617, 0.0
  %v682 = vmax.f32 %v618, 0.0
  %v683 = vmax.f32 %v619, 0.0
  %v684 = vmax.f32 %v620, 0.0
  %v685 = vmax.f32 %v621, 0.0
  %v686 = vmax.f32 %v622, 0.0
  %v687 = vmax.f32 %v623, 0.0
  %v688 = vmax.f32 %v624, 0.0
  %v689 = vmax.f32 %v625, 0.0
  %v690 = vmax.f32 %v626, 0.0
  %v691 = vmax.f32 %v627, 0.0
  %v692 = vmax.f32 %v628, 0.0
  %v693 = vmax.f32 %v629, 0.0
  %v694 = vmax.f32 %v630, 0.0
  %v695 = vmax.f32 %v631, 0.0
  %v696 = vmax.f32 %v632, 0.0
  %v697 = vld [vmem:[%s3] sm:$0xff]
  %v698 = vld [vmem:[%s3 + $0x8] sm:$0xff]
  %v699 = vld [vmem:[%s3 + $0x10] sm:$0xff]
  %v700 = vld [vmem:[%s3 + $0x18] sm:$0xff]
  %v701 = vld [vmem:[%s3 + $0x20] sm:$0xff]
  %v702 = vld [vmem:[%s3 + $0x28] sm:$0xff]
  %v703 = vld [vmem:[%s3 + $0x30] sm:$0xff]
  %v704 = vld [vmem:[%s3 + $0x38] sm:$0xff]
  %v705 = vld [vmem:[%s3 + $0x40] sm:$0xff]
  %v706 = vld [vmem:[%s3 + $0x48] sm:$0xff]
  %v707 = vld [vmem:[%s3 + $0x50] sm:$0xff]
  %v708 = vld [vmem:[%s3 + $0x58] sm:$0xff]
  %v709 = vld [vmem:[%s3 + $0x60] sm:$0xff]
  %v710 = vld [vmem:[%s3 + $0x68] sm:$0xff]
  %v711 = vld [vmem:[%s3 + $0x70] sm:$0xff]
  %v712 = vld [vmem:[%s3 + $0x78] sm:$0xff]
  %v713 = vld [vmem:[%s3 + $0x80] sm:$0xff]
  %v714 = vld [vmem:[%s3 + $0x88] sm:$0xff]
  %v715 = vld [vmem:[%s3 + $0x90] sm:$0xff]
  %v716 = vld [vmem:[%s3 + $0x98] sm:$0xff]
  %v717 = vld [vmem:[%s3 + $0xa0] sm:$0xff]
  %v718 = vld [vmem:[%s3 + $0xa8] sm:$0xff]
  %v719 = vld [vmem:[%s3 + $0xb0] sm:$0xff]
  %v720 = vld [vmem:[%s3 + $0xb8] sm:$0xff]
  %v721 = vld [vmem:[%s3 + $0xc0] sm:$0xff]
  %v722 = vld [vmem:[%s3 + $0xc8] sm:$0xff]
  %v723 = vld [vmem:[%s3 + $0xd0] sm:$0xff]
  %v724 = vld [vmem:[%s3 + $0xd8] sm:$0xff]
  %v725 = vld [vmem:[%s3 + $0xe0] sm:$0xff]
  %v726 = vld [vmem:[%s3 + $0xe8] sm:$0xff]
  %v727 = vld [vmem:[%s3 + $0xf0] sm:$0xff]
  %v728 = vld [vmem:[%s3 + $0xf8] sm:$0xff]
  %v729 = vld [vmem:[%s4] sm:$0x1]
  %v731 = vlaneseq
  %v732 = vshrl.u32 %v731, 7
  %v733 = vsub.s32 0, %v732
  %v734 = vrot.slane %v729, %v733
  %736 = vmatprep.subr.mxu0 0.0
  %737 = vmatpush1.msra.mxu0 %v697
  %738 = vmatprep.subr.mxu0 0.0
  %739 = vmatpush1.msra.mxu0 %v698
  %740 = vmatprep.subr.mxu0 0.0
  %741 = vmatpush1.msra.mxu0 %v699
  %742 = vmatprep.subr.mxu0 0.0
  %743 = vmatpush1.msra.mxu0 %v700
  %744 = vmatprep.subr.mxu0 0.0
  %745 = vmatpush1.msra.mxu0 %v701
  %746 = vmatprep.subr.mxu0 0.0
  %747 = vmatpush1.msra.mxu0 %v702
  %748 = vmatprep.subr.mxu0 0.0
  %749 = vmatpush1.msra.mxu0 %v703
  %750 = vmatprep.subr.mxu0 0.0
  %751 = vmatpush1.msra.mxu0 %v704
  %752 = vmatprep.subr.mxu0 0.0
  %753 = vmatpush1.msra.mxu0 %v705
  %754 = vmatprep.subr.mxu0 0.0
  %755 = vmatpush1.msra.mxu0 %v706
  %756 = vmatprep.subr.mxu0 0.0
  %757 = vmatpush1.msra.mxu0 %v707
  %758 = vmatprep.subr.mxu0 0.0
  %759 = vmatpush1.msra.mxu0 %v708
  %760 = vmatprep.subr.mxu0 0.0
  %761 = vmatpush1.msra.mxu0 %v709
  %762 = vmatprep.subr.mxu0 0.0
  %763 = vmatpush1.msra.mxu0 %v710
  %764 = vmatprep.subr.mxu0 0.0
  %765 = vmatpush1.msra.mxu0 %v711
  %766 = vmatprep.subr.mxu0 0.0
  %767 = vmatpush1.msra.mxu0 %v712
  %768 = vmatprep.subr.mxu0 0.0
  %769 = vmatpush1.msra.mxu0 %v713
  %770 = vmatprep.subr.mxu0 0.0
  %771 = vmatpush1.msra.mxu0 %v714
  %772 = vmatprep.subr.mxu0 0.0
  %773 = vmatpush1.msra.mxu0 %v715
  %774 = vmatprep.subr.mxu0 0.0
  %775 = vmatpush1.msra.mxu0 %v716
  %776 = vmatprep.subr.mxu0 0.0
  %777 = vmatpush1.msra.mxu0 %v717
  %778 = vmatprep.subr.mxu0 0.0
  %779 = vmatpush1.msra.mxu0 %v718
  %780 = vmatprep.subr.mxu0 0.0
  %781 = vmatpush1.msra.mxu0 %v719
  %782 = vmatprep.subr.mxu0 0.0
  %783 = vmatpush1.msra.mxu0 %v720
  %784 = vmatprep.subr.mxu0 0.0
  %785 = vmatpush1.msra.mxu0 %v721
  %786 = vmatprep.subr.mxu0 0.0
  %787 = vmatpush1.msra.mxu0 %v722
  %788 = vmatprep.subr.mxu0 0.0
  %789 = vmatpush1.msra.mxu0 %v723
  %790 = vmatprep.subr.mxu0 0.0
  %791 = vmatpush1.msra.mxu0 %v724
  %792 = vmatprep.subr.mxu0 0.0
  %793 = vmatpush1.msra.mxu0 %v725
  %794 = vmatprep.subr.mxu0 0.0
  %795 = vmatpush1.msra.mxu0 %v726
  %796 = vmatprep.subr.mxu0 0.0
  %797 = vmatpush1.msra.mxu0 %v727
  %798 = vmatprep.subr.mxu0 0.0
  %799 = vmatpush1.msra.mxu0 %v728
  %800 = vmatprep.mubr.f32.mxu0 %v634
  %801 = vmatmul.mubr.f32.gmra.mrb[0].mxu0 %v633
  %v802 = vpop.f32.mrb[0].mxu0
  %v803 = vadd.f32 %v734, %v802
  %v804 = vpop.f32.mrb[0].mxu0
  %805 = vmatprep.mubr.f32.mxu0 %v636
  %806 = vmatmul.mubr.f32.gmra.mrb[0].mxu0 %v635
  %v807 = vpop.f32.mrb[0].mxu0
  %v808 = vadd.f32 %v734, %v807
  %v809 = vpop.f32.mrb[0].mxu0
  %810 = vmatprep.mubr.f32.mxu0 %v638
  %811 = vmatmul.mubr.f32.gmra.mrb[0].mxu0 %v637
  %v812 = vpop.f32.mrb[0].mxu0
  %v813 = vadd.f32 %v734, %v812
  %v814 = vpop.f32.mrb[0].mxu0
  %815 = vmatprep.mubr.f32.mxu0 %v640
  %816 = vmatmul.mubr.f32.gmra.mrb[0].mxu0 %v639
  %v817 = vpop.f32.mrb[0].mxu0
  %v818 = vadd.f32 %v734, %v817
  %v819 = vpop.f32.mrb[0].mxu0
  %820 = vmatprep.mubr.f32.mxu0 %v642
  %821 = vmatmul.mubr.f32.gmra.mrb[0].mxu0 %v641
  %v822 = vpop.f32.mrb[0].mxu0
  %v823 = vadd.f32 %v734, %v822
  %v824 = vpop.f32.mrb[0].mxu0
  %825 = vmatprep.mubr.f32.mxu0 %v644
  %826 = vmatmul.mubr.f32.gmra.mrb[0].mxu0 %v643
  %v827 = vpop.f32.mrb[0].mxu0
  %v828 = vadd.f32 %v734, %v827
  %v829 = vpop.f32.mrb[0].mxu0
  %830 = vmatprep.mubr.f32.mxu0 %v646
  %831 = vmatmul.mubr.f32.gmra.mrb[0].mxu0 %v645
  %v832 = vpop.f32.mrb[0].mxu0
  %v833 = vadd.f32 %v734, %v832
  %v834 = vpop.f32.mrb[0].mxu0
  %835 = vmatprep.mubr.f32.mxu0 %v648
  %836 = vmatmul.mubr.f32.gmra.mrb[0].mxu0 %v647
  %v837 = vpop.f32.mrb[0].mxu0
  %v838 = vadd.f32 %v734, %v837
  %v839 = vpop.f32.mrb[0].mxu0
  %840 = vmatprep.mubr.f32.mxu0 %v650
  %841 = vmatmul.mubr.f32.gmra.mrb[0].mxu0 %v649
  %v842 = vpop.f32.mrb[0].mxu0
  %v843 = vadd.f32 %v734, %v842
  %v844 = vpop.f32.mrb[0].mxu0
  %845 = vmatprep.mubr.f32.mxu0 %v652
  %846 = vmatmul.mubr.f32.gmra.mrb[0].mxu0 %v651
  %v847 = vpop.f32.mrb[0].mxu0
  %v848 = vadd.f32 %v734, %v847
  %v849 = vpop.f32.mrb[0].mxu0
  %850 = vmatprep.mubr.f32.mxu0 %v654
  %851 = vmatmul.mubr.f32.gmra.mrb[0].mxu0 %v653
  %v852 = vpop.f32.mrb[0].mxu0
  %v853 = vadd.f32 %v734, %v852
  %v854 = vpop.f32.mrb[0].mxu0
  %855 = vmatprep.mubr.f32.mxu0 %v656
  %856 = vmatmul.mubr.f32.gmra.mrb[0].mxu0 %v655
  %v857 = vpop.f32.mrb[0].mxu0
  %v858 = vadd.f32 %v734, %v857
  %v859 = vpop.f32.mrb[0].mxu0
  %860 = vmatprep.mubr.f32.mxu0 %v658
  %861 = vmatmul.mubr.f32.gmra.mrb[0].mxu0 %v657
  %v862 = vpop.f32.mrb[0].mxu0
  %v863 = vadd.f32 %v734, %v862
  %v864 = vpop.f32.mrb[0].mxu0
  %865 = vmatprep.mubr.f32.mxu0 %v660
  %866 = vmatmul.mubr.f32.gmra.mrb[0].mxu0 %v659
  %v867 = vpop.f32.mrb[0].mxu0
  %v868 = vadd.f32 %v734, %v867
  %v869 = vpop.f32.mrb[0].mxu0
  %870 = vmatprep.mubr.f32.mxu0 %v662
  %871 = vmatmul.mubr.f32.gmra.mrb[0].mxu0 %v661
  %v872 = vpop.f32.mrb[0].mxu0
  %v873 = vadd.f32 %v734, %v872
  %v874 = vpop.f32.mrb[0].mxu0
  %875 = vmatprep.mubr.f32.mxu0 %v664
  %876 = vmatmul.mubr.f32.gmra.mrb[0].mxu0 %v663
  %v877 = vpop.f32.mrb[0].mxu0
  %v878 = vadd.f32 %v734, %v877
  %v879 = vpop.f32.mrb[0].mxu0
  %880 = vmatprep.mubr.f32.mxu0 %v666
  %881 = vmatmul.mubr.f32.gmra.mrb[0].mxu0 %v665
  %v882 = vpop.f32.mrb[0].mxu0
  %v883 = vadd.f32 %v734, %v882
  %v884 = vpop.f32.mrb[0].mxu0
  %885 = vmatprep.mubr.f32.mxu0 %v668
  %886 = vmatmul.mubr.f32.gmra.mrb[0].mxu0 %v667
  %v887 = vpop.f32.mrb[0].mxu0
  %v888 = vadd.f32 %v734, %v887
  %v889 = vpop.f32.mrb[0].mxu0
  %890 = vmatprep.mubr.f32.mxu0 %v670
  %891 = vmatmul.mubr.f32.gmra.mrb[0].mxu0 %v669
  %v892 = vpop.f32.mrb[0].mxu0
  %v893 = vadd.f32 %v734, %v892
  %v894 = vpop.f32.mrb[0].mxu0
  %895 = vmatprep.mubr.f32.mxu0 %v672
  %896 = vmatmul.mubr.f32.gmra.mrb[0].mxu0 %v671
  %v897 = vpop.f32.mrb[0].mxu0
  %v898 = vadd.f32 %v734, %v897
  %v899 = vpop.f32.mrb[0].mxu0
  %900 = vmatprep.mubr.f32.mxu0 %v674
  %901 = vmatmul.mubr.f32.gmra.mrb[0].mxu0 %v673
  %v902 = vpop.f32.mrb[0].mxu0
  %v903 = vadd.f32 %v734, %v902
  %v904 = vpop.f32.mrb[0].mxu0
  %905 = vmatprep.mubr.f32.mxu0 %v676
  %906 = vmatmul.mubr.f32.gmra.mrb[0].mxu0 %v675
  %v907 = vpop.f32.mrb[0].mxu0
  %v908 = vadd.f32 %v734, %v907
  %v909 = vpop.f32.mrb[0].mxu0
  %910 = vmatprep.mubr.f32.mxu0 %v678
  %911 = vmatmul.mubr.f32.gmra.mrb[0].mxu0 %v677
  %v912 = vpop.f32.mrb[0].mxu0
  %v913 = vadd.f32 %v734, %v912
  %v914 = vpop.f32.mrb[0].mxu0
  %915 = vmatprep.mubr.f32.mxu0 %v680
  %916 = vmatmul.mubr.f32.gmra.mrb[0].mxu0 %v679
  %v917 = vpop.f32.mrb[0].mxu0
  %v918 = vadd.f32 %v734, %v917
  %v919 = vpop.f32.mrb[0].mxu0
  %920 = vmatprep.mubr.f32.mxu0 %v682
  %921 = vmatmul.mubr.f32.gmra.mrb[0].mxu0 %v681
  %v922 = vpop.f32.mrb[0].mxu0
  %v923 = vadd.f32 %v734, %v922
  %v924 = vpop.f32.mrb[0].mxu0
  %925 = vmatprep.mubr.f32.mxu0 %v684
  %926 = vmatmul.mubr.f32.gmra.mrb[0].mxu0 %v683
  %v927 = vpop.f32.mrb[0].mxu0
  %v928 = vadd.f32 %v734, %v927
  %v929 = vpop.f32.mrb[0].mxu0
  %930 = vmatprep.mubr.f32.mxu0 %v686
  %931 = vmatmul.mubr.f32.gmra.mrb[0].mxu0 %v685
  %v932 = vpop.f32.mrb[0].mxu0
  %v933 = vadd.f32 %v734, %v932
  %v934 = vpop.f32.mrb[0].mxu0
  %935 = vmatprep.mubr.f32.mxu0 %v688
  %936 = vmatmul.mubr.f32.gmra.mrb[0].mxu0 %v687
  %v937 = vpop.f32.mrb[0].mxu0
  %v938 = vadd.f32 %v734, %v937
  %v939 = vpop.f32.mrb[0].mxu0
  %940 = vmatprep.mubr.f32.mxu0 %v690
  %941 = vmatmul.mubr.f32.gmra.mrb[0].mxu0 %v689
  %v942 = vpop.f32.mrb[0].mxu0
  %v943 = vadd.f32 %v734, %v942
  %v944 = vpop.f32.mrb[0].mxu0
  %945 = vmatprep.mubr.f32.mxu0 %v692
  %946 = vmatmul.mubr.f32.gmra.mrb[0].mxu0 %v691
  %v947 = vpop.f32.mrb[0].mxu0
  %v948 = vadd.f32 %v734, %v947
  %v949 = vpop.f32.mrb[0].mxu0
  %950 = vmatprep.mubr.f32.mxu0 %v694
  %951 = vmatmul.mubr.f32.gmra.mrb[0].mxu0 %v693
  %v952 = vpop.f32.mrb[0].mxu0
  %v953 = vadd.f32 %v734, %v952
  %v954 = vpop.f32.mrb[0].mxu0
  %955 = vmatprep.mubr.f32.mxu0 %v696
  %956 = vmatmul.mubr.f32.gmra.mrb[0].mxu0 %v695
  %v957 = vpop.f32.mrb[0].mxu0
  %v958 = vadd.f32 %v734, %v957
  %v959 = vpop.f32.mrb[0].mxu0
  %960 = vdwg.mxu0
  %vm961 = vcmask 15360
  %962 = vst.msk [vmem:[%s5] sm:$0xff] %vm961, %v803
  %963 = vst.msk [vmem:[%s5 + $0x8] sm:$0xff] %vm961, %v808
  %964 = vst.msk [vmem:[%s5 + $0x10] sm:$0xff] %vm961, %v813
  %965 = vst.msk [vmem:[%s5 + $0x18] sm:$0xff] %vm961, %v818
  %966 = vst.msk [vmem:[%s5 + $0x20] sm:$0xff] %vm961, %v823
  %967 = vst.msk [vmem:[%s5 + $0x28] sm:$0xff] %vm961, %v828
  %968 = vst.msk [vmem:[%s5 + $0x30] sm:$0xff] %vm961, %v833
  %969 = vst.msk [vmem:[%s5 + $0x38] sm:$0xff] %vm961, %v838
  %970 = vst.msk [vmem:[%s5 + $0x40] sm:$0xff] %vm961, %v843
  %971 = vst.msk [vmem:[%s5 + $0x48] sm:$0xff] %vm961, %v848
  %972 = vst.msk [vmem:[%s5 + $0x50] sm:$0xff] %vm961, %v853
  %973 = vst.msk [vmem:[%s5 + $0x58] sm:$0xff] %vm961, %v858
  %974 = vst.msk [vmem:[%s5 + $0x60] sm:$0xff] %vm961, %v863
  %975 = vst.msk [vmem:[%s5 + $0x68] sm:$0xff] %vm961, %v868
  %976 = vst.msk [vmem:[%s5 + $0x70] sm:$0xff] %vm961, %v873
  %977 = vst.msk [vmem:[%s5 + $0x78] sm:$0xff] %vm961, %v878
  %978 = vst.msk [vmem:[%s5 + $0x80] sm:$0xff] %vm961, %v883
  %979 = vst.msk [vmem:[%s5 + $0x88] sm:$0xff] %vm961, %v888
  %980 = vst.msk [vmem:[%s5 + $0x90] sm:$0xff] %vm961, %v893
  %981 = vst.msk [vmem:[%s5 + $0x98] sm:$0xff] %vm961, %v898
  %982 = vst.msk [vmem:[%s5 + $0xa0] sm:$0xff] %vm961, %v903
  %983 = vst.msk [vmem:[%s5 + $0xa8] sm:$0xff] %vm961, %v908
  %984 = vst.msk [vmem:[%s5 + $0xb0] sm:$0xff] %vm961, %v913
  %985 = vst.msk [vmem:[%s5 + $0xb8] sm:$0xff] %vm961, %v918
  %986 = vst.msk [vmem:[%s5 + $0xc0] sm:$0xff] %vm961, %v923
  %987 = vst.msk [vmem:[%s5 + $0xc8] sm:$0xff] %vm961, %v928
  %988 = vst.msk [vmem:[%s5 + $0xd0] sm:$0xff] %vm961, %v933
  %989 = vst.msk [vmem:[%s5 + $0xd8] sm:$0xff] %vm961, %v938
  %990 = vst.msk [vmem:[%s5 + $0xe0] sm:$0xff] %vm961, %v943
  %991 = vst.msk [vmem:[%s5 + $0xe8] sm:$0xff] %vm961, %v948
  %992 = vst.msk [vmem:[%s5 + $0xf0] sm:$0xff] %vm961, %v953
  %993 = vst.msk [vmem:[%s5 + $0xf8] sm:$0xff] %vm961, %v958
  // Predicated region
  $region22: #{tpu_custom_call.1} parent=0 // pred_check
    _
  $region23: #{tpu_custom_call.1} parent=0 // pred_check_branch
    %995 = sbr.rel (0) target = $region25
  $region24: #{tpu_custom_call.1} parent=0 // pred_region
    _
  $region25: #{tpu_custom_call.1} parent=0 // pred_fallthru
    _
  // Predicated region
  $region26: #{tpu_custom_call.1} parent=0 // pred_check
    _
  $region27: #{tpu_custom_call.1} parent=0 // pred_check_branch
    %997 = sbr.rel (0) target = $region29
  $region28: #{tpu_custom_call.1} parent=0 // pred_region
    _
  $region29: #{tpu_custom_call.1} parent=0 // pred_fallthru
    _

</llo_original>
